<compile_context>
chip_gen: v5e
topology: v5e:2x2
jax: 0.10.0
libtpu: 0.0.40
codegen_flags: <defaults>
</compile_context>

<pallas_src>
import functools

import jax
import jax.numpy as jnp
from jax import lax
from jax.experimental import pallas as pl
from jax.experimental.pallas import tpu as pltpu  # noqa: F401  (TPU backend)

EPS = 1e-3


def bn_relu_kernel(x_ref, gb_ref, o_ref, *, true_l):
    # x_ref: (C, L) f32.  gb_ref: (C, 2) f32 -> [:, 0]=gamma, [:, 1]=beta.
    x = x_ref[...]
    inv_l = 1.0 / true_l

    # One-pass statistics over the lane axis.
    s1 = jnp.sum(x, axis=1, keepdims=True)
    s2 = jnp.sum(x * x, axis=1, keepdims=True)
    mean = s1 * inv_l
    var = s2 * inv_l - mean * mean  # biased variance over (N, H, W)

    inv_std = lax.rsqrt(var + EPS)

    # Fold per-channel constants, then a single fused elementwise pass.
    gamma = gb_ref[:, 0:1]  # (C, 1)
    beta = gb_ref[:, 1:2]   # (C, 1)
    a = inv_std * gamma
    b = beta - mean * a
    o_ref[...] = jnp.maximum(x * a + b, 0.0)


def batchnorm_relu(x_nchw, gamma, beta):
    n, c, h, w = x_nchw.shape
    L = n * h * w

    # NCHW -> (C, N*H*W); for N=1 this is a free permutation. No padding:
    # block_shape == full array dims satisfies the (8,128) rule directly.
    x2d = jnp.transpose(x_nchw, (1, 0, 2, 3)).reshape(c, L).astype(jnp.float32)
    gb = jnp.stack(
        [gamma.astype(jnp.float32), beta.astype(jnp.float32)], axis=1
    )  # (C, 2)

    kernel = functools.partial(bn_relu_kernel, true_l=float(L))

    out2d = pl.pallas_call(
        kernel,
        out_shape=jax.ShapeDtypeStruct((c, L), jnp.float32),
        in_specs=[
            pl.BlockSpec((c, L), lambda: (0, 0)),
            pl.BlockSpec((c, 2), lambda: (0, 0)),
        ],
        out_specs=pl.BlockSpec((c, L), lambda: (0, 0)),
        cost_estimate=pl.CostEstimate(
            flops=6 * c * L,
            transcendentals=c,
            bytes_accessed=2 * c * L * 4 + 2 * c * 4,
        ),
    )(x2d, gb)

    # (C, N*H*W) -> NCHW
    return jnp.transpose(out2d.reshape(c, n, h, w), (1, 0, 2, 3)).astype(
        x_nchw.dtype
    )


def reference(x_nchw, gamma, beta):
    x = x_nchw.astype(jnp.float32)
    mean = jnp.mean(x, axis=(0, 2, 3), keepdims=True)
    var = jnp.mean((x - mean) ** 2, axis=(0, 2, 3), keepdims=True)
    y = (x - mean) / jnp.sqrt(var + EPS)
    y = y * gamma.reshape(1, -1, 1, 1) + beta.reshape(1, -1, 1, 1)
    return jnp.maximum(y, 0.0)


if __name__ == "__main__":
    key = jax.random.PRNGKey(0)
    kx, kg, kb = jax.random.split(key, 3)

    N, C, H, W = 1, 32, 28, 28  # matches x37 = torch.randn([1, 32, 28, 28])
    x = jax.random.normal(kx, (N, C, H, W), dtype=jnp.float32)
    # PyTorch default init is gamma=1, beta=0; perturb deterministically so the
    # affine path is exercised.
    gamma = 1.0 + 0.1 * jax.random.normal(kg, (C,), dtype=jnp.float32)
    beta = 0.1 * jax.random.normal(kb, (C,), dtype=jnp.float32)

    out = batchnorm_relu(x, gamma, beta)
    out = jax.block_until_ready(out)

    ref = reference(x, gamma, beta)
    assert out.shape == (N, C, H, W)
    assert jnp.allclose(out, ref, atol=1e-4, rtol=1e-4), float(
        jnp.max(jnp.abs(out - ref))
    )
    print("KERNEL_OK")
</pallas_src>

<mosaic_0001>
module attributes {stable_mosaic.version = 11 : i64} {
  func.func @bn_relu_kernel(%arg0: memref<32x784xf32, #tpu.memory_space<vmem>>, %arg1: memref<32x2xf32, #tpu.memory_space<vmem>>, %arg2: memref<32x784xf32, #tpu.memory_space<vmem>>) attributes {dimension_semantics = [], scalar_prefetch = 0 : i64, scratch_operands = 0 : i64, tpu.core_type = #tpu.core_type<tc>} {
    %c0 = arith.constant 0 : index
    %c0_0 = arith.constant 0 : index
    %0 = vector.load %arg0[%c0, %c0_0] : memref<32x784xf32, #tpu.memory_space<vmem>>, vector<32x784xf32>
    %cst = arith.constant dense<0.000000e+00> : vector<32xf32>
    %1 = vector.multi_reduction <add>, %0, %cst [1] : vector<32x784xf32> to vector<32xf32>
    %2 = vector.shape_cast %1 : vector<32xf32> to vector<32x1xf32>
    %3 = arith.mulf %0, %0 : vector<32x784xf32>
    %cst_1 = arith.constant dense<0.000000e+00> : vector<32xf32>
    %4 = vector.multi_reduction <add>, %3, %cst_1 [1] : vector<32x784xf32> to vector<32xf32>
    %5 = vector.shape_cast %4 : vector<32xf32> to vector<32x1xf32>
    %cst_2 = arith.constant 0.00127551018 : f32
    %6 = vector.broadcast %cst_2 : f32 to vector<32x1xf32>
    %7 = arith.mulf %2, %6 : vector<32x1xf32>
    %cst_3 = arith.constant 0.00127551018 : f32
    %8 = vector.broadcast %cst_3 : f32 to vector<32x1xf32>
    %9 = arith.mulf %5, %8 : vector<32x1xf32>
    %10 = arith.mulf %7, %7 : vector<32x1xf32>
    %11 = arith.subf %9, %10 : vector<32x1xf32>
    %cst_4 = arith.constant 1.000000e-03 : f32
    %12 = vector.broadcast %cst_4 : f32 to vector<32x1xf32>
    %13 = arith.addf %11, %12 : vector<32x1xf32>
    %14 = math.rsqrt %13 : vector<32x1xf32>
    %c0_5 = arith.constant 0 : index
    %c0_6 = arith.constant 0 : index
    %15 = vector.load %arg1[%c0_5, %c0_6] : memref<32x2xf32, #tpu.memory_space<vmem>>, vector<32x1xf32>
    %c0_7 = arith.constant 0 : index
    %c1 = arith.constant 1 : index
    %16 = vector.load %arg1[%c0_7, %c1] : memref<32x2xf32, #tpu.memory_space<vmem>>, vector<32x1xf32>
    %17 = arith.mulf %14, %15 : vector<32x1xf32>
    %18 = arith.mulf %7, %17 : vector<32x1xf32>
    %19 = arith.subf %16, %18 : vector<32x1xf32>
    %20 = vector.broadcast %17 : vector<32x1xf32> to vector<32x784xf32>
    %21 = arith.mulf %0, %20 : vector<32x784xf32>
    %22 = vector.broadcast %19 : vector<32x1xf32> to vector<32x784xf32>
    %23 = arith.addf %21, %22 : vector<32x784xf32>
    %cst_8 = arith.constant 0.000000e+00 : f32
    %24 = vector.broadcast %cst_8 : f32 to vector<32x784xf32>
    %25 = arith.maximumf %23, %24 : vector<32x784xf32>
    %c0_9 = arith.constant 0 : index
    %c0_10 = arith.constant 0 : index
    %26 = vector.load %arg2[%c0_9, %c0_10] : memref<32x784xf32, #tpu.memory_space<vmem>>, vector<32x784xf32>
    tpu.vector_store %arg2[%c0_9, %c0_10], %25 {strides = array<i32>} : memref<32x784xf32, #tpu.memory_space<vmem>>, vector<32x784xf32>,
    return
  }
}

</mosaic_0001>

<llo_original>
// kernel: tpu_custom_call.1
$region0: #{tpu_custom_call.1}
  #allocation0 [shape = 'u32[]', space=smem, size = 0x4, offset = 0x4, fixed_abs, tag = 'smem constant byte address 0x4 - core index']
  #allocation1 [shape = 'u32[72,128]{1,0:T(1,128)}', space=vmem, size = 0x9000, scoped, tag = 'internal scratch']
  %s0 = inlined_call_operand.hbm [shape: f32[32,784], index: 0, kind: input, shape index: {}]
  %s1 = inlined_call_operand.vmem [shape: f32[32,2], index: 1, kind: input, shape index: {}]
  %s2 = inlined_call_operand.hbm [shape: f32[32,784], index: 2, kind: output, shape index: {}]
  %s3 = sld [smem:[#allocation0]]
  $region22: #{tpu_custom_call.1} parent=0
    _
  %s5 = ssub.s32 1, %s3
  %s6 = scalar_select 0, %s5, %s3
  $region1: #{tpu_custom_call.1} parent=0
    #allocation2 [shape = 'u8[114688]{0}', space=vmem, size = 0x1c000, scoped, tag = 'input window, operand 0, single buffered']
    #allocation3 [shape = 's32[1]{0}', space=sflag, size = 0x4, scoped, tag = 'scoped memory for tpu_custom_call.1']
    #allocation4 [shape = 's32[1]{0}', space=sflag, size = 0x4, scoped, tag = 'scoped memory for tpu_custom_call.1']
    #allocation5 [shape = 'u8[114688]{0}', space=vmem, size = 0x1c000, scoped, tag = 'output window, operand 0, single buffered']
    %7 = vsyncpa [#allocation3], 0
    %8 = vsyncpa [#allocation4], 0
    // Predicated region
    $region2: #{tpu_custom_call.1} parent=1 // pred_check
      _
    $region3: #{tpu_custom_call.1} parent=1 // pred_check_branch
      %10 = sbr.rel (0) target = $region5
    $region4: #{tpu_custom_call.1} parent=1 // pred_region
      %12 = vsyncadd [#allocation3], 0
      %s13 = sshll.u32 %s0, 4
      %s14 = int_to_ptr.hbm [resolvable:$true] %s13
      %s15 = sshll.u32 [#allocation2], 4
      %s16 = int_to_ptr.vmem [resolvable:$true] %s15
      %21 = dma.hbm_to_vmem [thread:$0]  %s14, 3584, %s16, [#allocation3], 896, 896, 56
    $region5: #{tpu_custom_call.1} parent=1 // pred_fallthru
      _
    // Predicated region
    $region6: #{tpu_custom_call.1} parent=1 // pred_check
      _
    $region7: #{tpu_custom_call.1} parent=1 // pred_check_branch
      %23 = sbr.rel (0) target = $region9
    $region8: #{tpu_custom_call.1} parent=1 // pred_region
      _
    $region9: #{tpu_custom_call.1} parent=1 // pred_fallthru
      _
    // Predicated region
    $region10: #{tpu_custom_call.1} parent=1 // pred_check
      _
    $region11: #{tpu_custom_call.1} parent=1 // pred_check_branch
      %25 = sbr.rel (0) target = $region13
    $region12: #{tpu_custom_call.1} parent=1 // pred_region
      %27 = dma.done [#allocation3], 3584
    $region13: #{tpu_custom_call.1} parent=1 // pred_fallthru
      _
    %v28 = vld [vmem:[#allocation2] sm:$0xff]
    %v29 = vld [vmem:[#allocation2 + $0x8] sm:$0xff]
    %v30 = vld [vmem:[#allocation2 + $0x10] sm:$0xff]
    %v31 = vld [vmem:[#allocation2 + $0x18] sm:$0xff]
    %v32 = vld [vmem:[#allocation2 + $0x20] sm:$0xff]
    %v33 = vld [vmem:[#allocation2 + $0x28] sm:$0xff]
    %v34 = vld [vmem:[#allocation2 + $0x30] sm:$0xff]
    %v35 = vld [vmem:[#allocation2 + $0x38] sm:$0xff]
    %v36 = vld [vmem:[#allocation2 + $0x40] sm:$0xff]
    %v37 = vld [vmem:[#allocation2 + $0x48] sm:$0xff]
    %v38 = vld [vmem:[#allocation2 + $0x50] sm:$0xff]
    %v39 = vld [vmem:[#allocation2 + $0x58] sm:$0xff]
    %v40 = vld [vmem:[#allocation2 + $0x60] sm:$0xff]
    %v41 = vld [vmem:[#allocation2 + $0x68] sm:$0xff]
    %v42 = vld [vmem:[#allocation2 + $0x70] sm:$0xff]
    %v43 = vld [vmem:[#allocation2 + $0x78] sm:$0xff]
    %v44 = vld [vmem:[#allocation2 + $0x80] sm:$0xff]
    %v45 = vld [vmem:[#allocation2 + $0x88] sm:$0xff]
    %v46 = vld [vmem:[#allocation2 + $0x90] sm:$0xff]
    %v47 = vld [vmem:[#allocation2 + $0x98] sm:$0xff]
    %v48 = vld [vmem:[#allocation2 + $0xa0] sm:$0xff]
    %v49 = vld [vmem:[#allocation2 + $0xa8] sm:$0xff]
    %v50 = vld [vmem:[#allocation2 + $0xb0] sm:$0xff]
    %v51 = vld [vmem:[#allocation2 + $0xb8] sm:$0xff]
    %v52 = vld [vmem:[#allocation2 + $0xc0] sm:$0xff]
    %v53 = vld [vmem:[#allocation2 + $0xc8] sm:$0xff]
    %v54 = vld [vmem:[#allocation2 + $0xd0] sm:$0xff]
    %v55 = vld [vmem:[#allocation2 + $0xd8] sm:$0xff]
    %v56 = vadd.f32 %v28, %v29
    %v57 = vadd.f32 %v56, %v30
    %v58 = vadd.f32 %v57, %v31
    %v59 = vadd.f32 %v58, %v32
    %v60 = vadd.f32 %v59, %v33
    %vm61 = vcmask 130048
    %v62 = vsel %vm61, %v34, 0.0
    %v63 = vadd.f32 %v60, %v62
    %64 = vadd.xlane.f32.xlu0 %v63
    %v65 = vpop.xlane.xlu0 %64
    %v66 = vadd.f32 %v35, %v36
    %v67 = vadd.f32 %v66, %v37
    %v68 = vadd.f32 %v67, %v38
    %v69 = vadd.f32 %v68, %v39
    %v70 = vadd.f32 %v69, %v40
    %v71 = vsel %vm61, %v41, 0.0
    %v72 = vadd.f32 %v70, %v71
    %73 = vadd.xlane.f32.xlu0 %v72
    %v74 = vpop.xlane.xlu0 %73
    %v75 = vadd.f32 %v42, %v43
    %v76 = vadd.f32 %v75, %v44
    %v77 = vadd.f32 %v76, %v45
    %v78 = vadd.f32 %v77, %v46
    %v79 = vadd.f32 %v78, %v47
    %v80 = vsel %vm61, %v48, 0.0
    %v81 = vadd.f32 %v79, %v80
    %82 = vadd.xlane.f32.xlu0 %v81
    %v83 = vpop.xlane.xlu0 %82
    %v84 = vadd.f32 %v49, %v50
    %v85 = vadd.f32 %v84, %v51
    %v86 = vadd.f32 %v85, %v52
    %v87 = vadd.f32 %v86, %v53
    %v88 = vadd.f32 %v87, %v54
    %v89 = vsel %vm61, %v55, 0.0
    %v90 = vadd.f32 %v88, %v89
    %91 = vadd.xlane.f32.xlu0 %v90
    %v92 = vpop.xlane.xlu0 %91
    %v93 = vmul.f32 %v28, %v28
    %v94 = vmul.f32 %v29, %v29
    %v95 = vmul.f32 %v30, %v30
    %v96 = vmul.f32 %v31, %v31
    %v97 = vmul.f32 %v32, %v32
    %v98 = vmul.f32 %v33, %v33
    %v99 = vmul.f32 %v34, %v34
    %v100 = vmul.f32 %v35, %v35
    %v101 = vmul.f32 %v36, %v36
    %v102 = vmul.f32 %v37, %v37
    %v103 = vmul.f32 %v38, %v38
    %v104 = vmul.f32 %v39, %v39
    %v105 = vmul.f32 %v40, %v40
    %v106 = vmul.f32 %v41, %v41
    %v107 = vmul.f32 %v42, %v42
    %v108 = vmul.f32 %v43, %v43
    %v109 = vmul.f32 %v44, %v44
    %v110 = vmul.f32 %v45, %v45
    %v111 = vmul.f32 %v46, %v46
    %v112 = vmul.f32 %v47, %v47
    %v113 = vmul.f32 %v48, %v48
    %v114 = vmul.f32 %v49, %v49
    %v115 = vmul.f32 %v50, %v50
    %v116 = vmul.f32 %v51, %v51
    %v117 = vmul.f32 %v52, %v52
    %v118 = vmul.f32 %v53, %v53
    %v119 = vmul.f32 %v54, %v54
    %v120 = vmul.f32 %v55, %v55
    %v121 = vadd.f32 %v93, %v94
    %v122 = vadd.f32 %v121, %v95
    %v123 = vadd.f32 %v122, %v96
    %v124 = vadd.f32 %v123, %v97
    %v125 = vadd.f32 %v124, %v98
    %v126 = vsel %vm61, %v99, 0.0
    %v127 = vadd.f32 %v125, %v126
    %128 = vadd.xlane.f32.xlu0 %v127
    %v129 = vpop.xlane.xlu0 %128
    %v130 = vadd.f32 %v100, %v101
    %v131 = vadd.f32 %v130, %v102
    %v132 = vadd.f32 %v131, %v103
    %v133 = vadd.f32 %v132, %v104
    %v134 = vadd.f32 %v133, %v105
    %v135 = vsel %vm61, %v106, 0.0
    %v136 = vadd.f32 %v134, %v135
    %137 = vadd.xlane.f32.xlu0 %v136
    %v138 = vpop.xlane.xlu0 %137
    %v139 = vadd.f32 %v107, %v108
    %v140 = vadd.f32 %v139, %v109
    %v141 = vadd.f32 %v140, %v110
    %v142 = vadd.f32 %v141, %v111
    %v143 = vadd.f32 %v142, %v112
    %v144 = vsel %vm61, %v113, 0.0
    %v145 = vadd.f32 %v143, %v144
    %146 = vadd.xlane.f32.xlu0 %v145
    %v147 = vpop.xlane.xlu0 %146
    %v148 = vadd.f32 %v114, %v115
    %v149 = vadd.f32 %v148, %v116
    %v150 = vadd.f32 %v149, %v117
    %v151 = vadd.f32 %v150, %v118
    %v152 = vadd.f32 %v151, %v119
    %v153 = vsel %vm61, %v120, 0.0
    %v154 = vadd.f32 %v152, %v153
    %155 = vadd.xlane.f32.xlu0 %v154
    %v156 = vpop.xlane.xlu0 %155
    %v157 = vmul.f32 %v65, 0.0012755102
    %v158 = vmul.f32 %v74, 0.0012755102
    %v159 = vmul.f32 %v83, 0.0012755102
    %v160 = vmul.f32 %v92, 0.0012755102
    %v161 = vmul.f32 %v129, 0.0012755102
    %v162 = vmul.f32 %v138, 0.0012755102
    %v163 = vmul.f32 %v147, 0.0012755102
    %v164 = vmul.f32 %v156, 0.0012755102
    %v165 = vmul.f32 %v157, %v157
    %v166 = vmul.f32 %v158, %v158
    %v167 = vmul.f32 %v159, %v159
    %v168 = vmul.f32 %v160, %v160
    %v169 = vsub.f32 %v161, %v165
    %v170 = vsub.f32 %v162, %v166
    %v171 = vsub.f32 %v163, %v167
    %v172 = vsub.f32 %v164, %v168
    %v173 = vadd.f32 %v169, 0.001
    %v174 = vadd.f32 %v170, 0.001
    %v175 = vadd.f32 %v171, 0.001
    %v176 = vadd.f32 %v172, 0.001
    %v177 = vrsqrt.pop %v173
    %v178 = vmul.f32 %v177, %v173
    %v179 = vmul.f32 %v178, %v177
    %v180 = vmul.f32 0.5, %v179
    %v181 = vsub.f32 1.5, %v180
    %v182 = vmul.f32 %v177, %v181
    %vm183 = vweird.f32 %v173
    %vm184 = vweird.f32 %v177
    %vm185 = vmor %vm183, %vm184
    %v186 = vsel %vm185, %v177, %v182
    %v187 = vrsqrt.pop %v174
    %v188 = vmul.f32 %v187, %v174
    %v189 = vmul.f32 %v188, %v187
    %v190 = vmul.f32 0.5, %v189
    %v191 = vsub.f32 1.5, %v190
    %v192 = vmul.f32 %v187, %v191
    %vm193 = vweird.f32 %v174
    %vm194 = vweird.f32 %v187
    %vm195 = vmor %vm193, %vm194
    %v196 = vsel %vm195, %v187, %v192
    %v197 = vrsqrt.pop %v175
    %v198 = vmul.f32 %v197, %v175
    %v199 = vmul.f32 %v198, %v197
    %v200 = vmul.f32 0.5, %v199
    %v201 = vsub.f32 1.5, %v200
    %v202 = vmul.f32 %v197, %v201
    %vm203 = vweird.f32 %v175
    %vm204 = vweird.f32 %v197
    %vm205 = vmor %vm203, %vm204
    %v206 = vsel %vm205, %v197, %v202
    %v207 = vrsqrt.pop %v176
    %v208 = vmul.f32 %v207, %v176
    %v209 = vmul.f32 %v208, %v207
    %v210 = vmul.f32 0.5, %v209
    %v211 = vsub.f32 1.5, %v210
    %v212 = vmul.f32 %v207, %v211
    %vm213 = vweird.f32 %v176
    %vm214 = vweird.f32 %v207
    %vm215 = vmor %vm213, %vm214
    %v216 = vsel %vm215, %v207, %v212
    %v217 = vld [vmem:[%s1] sm:$0xff]
    %v218 = vld [vmem:[%s1 + $0x8] sm:$0xff]
    %v219 = vld [vmem:[%s1 + $0x10] sm:$0xff]
    %v220 = vld [vmem:[%s1 + $0x18] sm:$0xff]
    %v221 = vmul.f32 %v186, %v217
    %v222 = vmul.f32 %v196, %v218
    %v223 = vmul.f32 %v206, %v219
    %v224 = vmul.f32 %v216, %v220
    %v225 = vmul.f32 %v157, %v221
    %v226 = vmul.f32 %v158, %v222
    %v227 = vmul.f32 %v159, %v223
    %v228 = vmul.f32 %v160, %v224
    %233 = vrot.lane.b32.xlu0 %v225, 1
    %v234 = vpop.permute.xlu0 %233
    %235 = vrot.lane.b32.xlu0 %v226, 1
    %v236 = vpop.permute.xlu0 %235
    %237 = vrot.lane.b32.xlu0 %v227, 1
    %v238 = vpop.permute.xlu0 %237
    %239 = vrot.lane.b32.xlu0 %v228, 1
    %v240 = vpop.permute.xlu0 %239
    %v245 = vsub.f32 %v217, %v234
    %v246 = vsub.f32 %v218, %v236
    %v247 = vsub.f32 %v219, %v238
    %v248 = vsub.f32 %v220, %v240
    %250 = vset.pattern.permute.xlu0 0
    %251 = vperm.xlu0 %250, %v221
    %v252 = vpop.permute.xlu0 %251
    %255 = vset.pattern.permute.xlu0 0
    %256 = vperm.xlu0 %255, %v222
    %v257 = vpop.permute.xlu0 %256
    %260 = vset.pattern.permute.xlu0 0
    %261 = vperm.xlu0 %260, %v223
    %v262 = vpop.permute.xlu0 %261
    %265 = vset.pattern.permute.xlu0 0
    %266 = vperm.xlu0 %265, %v224
    %v267 = vpop.permute.xlu0 %266
    %v269 = vmul.f32 %v28, %v252
    %v270 = vmul.f32 %v29, %v252
    %v271 = vmul.f32 %v30, %v252
    %v272 = vmul.f32 %v31, %v252
    %v273 = vmul.f32 %v32, %v252
    %v274 = vmul.f32 %v33, %v252
    %v275 = vmul.f32 %v34, %v252
    %v276 = vmul.f32 %v35, %v257
    %v277 = vmul.f32 %v36, %v257
    %v278 = vmul.f32 %v37, %v257
    %v279 = vmul.f32 %v38, %v257
    %v280 = vmul.f32 %v39, %v257
    %v281 = vmul.f32 %v40, %v257
    %v282 = vmul.f32 %v41, %v257
    %v283 = vmul.f32 %v42, %v262
    %v284 = vmul.f32 %v43, %v262
    %v285 = vmul.f32 %v44, %v262
    %v286 = vmul.f32 %v45, %v262
    %v287 = vmul.f32 %v46, %v262
    %v288 = vmul.f32 %v47, %v262
    %v289 = vmul.f32 %v48, %v262
    %v290 = vmul.f32 %v49, %v267
    %v291 = vmul.f32 %v50, %v267
    %v292 = vmul.f32 %v51, %v267
    %v293 = vmul.f32 %v52, %v267
    %v294 = vmul.f32 %v53, %v267
    %v295 = vmul.f32 %v54, %v267
    %v296 = vmul.f32 %v55, %v267
    %298 = vset.pattern.permute.xlu0 1
    %299 = vperm.xlu0 %298, %v245
    %v300 = vpop.permute.xlu0 %299
    %303 = vset.pattern.permute.xlu0 1
    %304 = vperm.xlu0 %303, %v246
    %v305 = vpop.permute.xlu0 %304
    %308 = vset.pattern.permute.xlu0 1
    %309 = vperm.xlu0 %308, %v247
    %v310 = vpop.permute.xlu0 %309
    %313 = vset.pattern.permute.xlu0 1
    %314 = vperm.xlu0 %313, %v248
    %v315 = vpop.permute.xlu0 %314
    %v317 = vadd.f32 %v269, %v300
    %v318 = vadd.f32 %v270, %v300
    %v319 = vadd.f32 %v271, %v300
    %v320 = vadd.f32 %v272, %v300
    %v321 = vadd.f32 %v273, %v300
    %v322 = vadd.f32 %v274, %v300
    %v323 = vadd.f32 %v275, %v300
    %v324 = vadd.f32 %v276, %v305
    %v325 = vadd.f32 %v277, %v305
    %v326 = vadd.f32 %v278, %v305
    %v327 = vadd.f32 %v279, %v305
    %v328 = vadd.f32 %v280, %v305
    %v329 = vadd.f32 %v281, %v305
    %v330 = vadd.f32 %v282, %v305
    %v331 = vadd.f32 %v283, %v310
    %v332 = vadd.f32 %v284, %v310
    %v333 = vadd.f32 %v285, %v310
    %v334 = vadd.f32 %v286, %v310
    %v335 = vadd.f32 %v287, %v310
    %v336 = vadd.f32 %v288, %v310
    %v337 = vadd.f32 %v289, %v310
    %v338 = vadd.f32 %v290, %v315
    %v339 = vadd.f32 %v291, %v315
    %v340 = vadd.f32 %v292, %v315
    %v341 = vadd.f32 %v293, %v315
    %v342 = vadd.f32 %v294, %v315
    %v343 = vadd.f32 %v295, %v315
    %v344 = vadd.f32 %v296, %v315
    %v345 = vmax.f32 %v317, 0.0
    %v346 = vmax.f32 %v318, 0.0
    %v347 = vmax.f32 %v319, 0.0
    %v348 = vmax.f32 %v320, 0.0
    %v349 = vmax.f32 %v321, 0.0
    %v350 = vmax.f32 %v322, 0.0
    %v351 = vmax.f32 %v323, 0.0
    %v352 = vmax.f32 %v324, 0.0
    %v353 = vmax.f32 %v325, 0.0
    %v354 = vmax.f32 %v326, 0.0
    %v355 = vmax.f32 %v327, 0.0
    %v356 = vmax.f32 %v328, 0.0
    %v357 = vmax.f32 %v329, 0.0
    %v358 = vmax.f32 %v330, 0.0
    %v359 = vmax.f32 %v331, 0.0
    %v360 = vmax.f32 %v332, 0.0
    %v361 = vmax.f32 %v333, 0.0
    %v362 = vmax.f32 %v334, 0.0
    %v363 = vmax.f32 %v335, 0.0
    %v364 = vmax.f32 %v336, 0.0
    %v365 = vmax.f32 %v337, 0.0
    %v366 = vmax.f32 %v338, 0.0
    %v367 = vmax.f32 %v339, 0.0
    %v368 = vmax.f32 %v340, 0.0
    %v369 = vmax.f32 %v341, 0.0
    %v370 = vmax.f32 %v342, 0.0
    %v371 = vmax.f32 %v343, 0.0
    %v372 = vmax.f32 %v344, 0.0
    %373 = vst [vmem:[#allocation5] sm:$0xff] %v345
    %374 = vst [vmem:[#allocation5 + $0x8] sm:$0xff] %v346
    %375 = vst [vmem:[#allocation5 + $0x10] sm:$0xff] %v347
    %376 = vst [vmem:[#allocation5 + $0x18] sm:$0xff] %v348
    %377 = vst [vmem:[#allocation5 + $0x20] sm:$0xff] %v349
    %378 = vst [vmem:[#allocation5 + $0x28] sm:$0xff] %v350
    %379 = vst.msk [vmem:[#allocation5 + $0x30] sm:$0xff] %vm61, %v351
    %380 = vst [vmem:[#allocation5 + $0x38] sm:$0xff] %v352
    %381 = vst [vmem:[#allocation5 + $0x40] sm:$0xff] %v353
    %382 = vst [vmem:[#allocation5 + $0x48] sm:$0xff] %v354
    %383 = vst [vmem:[#allocation5 + $0x50] sm:$0xff] %v355
    %384 = vst [vmem:[#allocation5 + $0x58] sm:$0xff] %v356
    %385 = vst [vmem:[#allocation5 + $0x60] sm:$0xff] %v357
    %386 = vst.msk [vmem:[#allocation5 + $0x68] sm:$0xff] %vm61, %v358
    %387 = vst [vmem:[#allocation5 + $0x70] sm:$0xff] %v359
    %388 = vst [vmem:[#allocation5 + $0x78] sm:$0xff] %v360
    %389 = vst [vmem:[#allocation5 + $0x80] sm:$0xff] %v361
    %390 = vst [vmem:[#allocation5 + $0x88] sm:$0xff] %v362
    %391 = vst [vmem:[#allocation5 + $0x90] sm:$0xff] %v363
    %392 = vst [vmem:[#allocation5 + $0x98] sm:$0xff] %v364
    %393 = vst.msk [vmem:[#allocation5 + $0xa0] sm:$0xff] %vm61, %v365
    %394 = vst [vmem:[#allocation5 + $0xa8] sm:$0xff] %v366
    %395 = vst [vmem:[#allocation5 + $0xb0] sm:$0xff] %v367
    %396 = vst [vmem:[#allocation5 + $0xb8] sm:$0xff] %v368
    %397 = vst [vmem:[#allocation5 + $0xc0] sm:$0xff] %v369
    %398 = vst [vmem:[#allocation5 + $0xc8] sm:$0xff] %v370
    %399 = vst [vmem:[#allocation5 + $0xd0] sm:$0xff] %v371
    %400 = vst.msk [vmem:[#allocation5 + $0xd8] sm:$0xff] %vm61, %v372
    // Predicated region
    $region14: #{tpu_custom_call.1} parent=1 // pred_check
      _
    $region15: #{tpu_custom_call.1} parent=1 // pred_check_branch
      %402 = sbr.rel (0) target = $region17
    $region16: #{tpu_custom_call.1} parent=1 // pred_region
      %404 = vsyncadd [#allocation4], 0
      %s405 = sshll.u32 [#allocation5], 4
      %s406 = int_to_ptr.vmem [resolvable:$true] %s405
      %s407 = sshll.u32 %s2, 4
      %s408 = int_to_ptr.hbm [resolvable:$true] %s407
      %413 = dma.vmem_to_hbm [thread:$0]  %s406, 3584, %s408, [#allocation4], 896, 896, 56
    $region17: #{tpu_custom_call.1} parent=1 // pred_fallthru
      _
    // Predicated region
    $region18: #{tpu_custom_call.1} parent=1 // pred_check
      _
    $region19: #{tpu_custom_call.1} parent=1 // pred_check_branch
      %415 = sbr.rel (0) target = $region21
    $region20: #{tpu_custom_call.1} parent=1 // pred_region
      %417 = dma.done [#allocation4], 3584
    $region21: #{tpu_custom_call.1} parent=1 // pred_fallthru
      _
    %418 = vsyncpa [#allocation3], 1
    %419 = vsyncpa [#allocation4], 1

</llo_original>
